<compile_context>
chip_gen: v5e
topology: v5e:2x2
jax: 0.10.0
libtpu: 0.0.40
codegen_flags: <defaults>
</compile_context>

<pallas_src>
import math

import jax
import jax.numpy as jnp
from jax.experimental import pallas as pl
from jax.experimental.pallas import tpu as pltpu


# --------------------------------------------------------------------------- #
# Generation-aware sizing helpers
# --------------------------------------------------------------------------- #
def _is_v7x() -> bool:
    try:
        kind = jax.devices()[0].device_kind.lower()
    except Exception:
        return False
    return "v7" in kind


def _per_stream_tile_bytes() -> int:
    # v7x (3.2 TB/s/TC): 2 MiB/step makes the ~0.35us fixed per-step overhead ~25% of step
    # time -> target ~4 MiB per streamed input.  v5e/v6e: 2 MiB is already >=85-93% roofline.
    return (4 if _is_v7x() else 2) * 1024 * 1024


def _vmem_limit_bytes() -> int:
    # v7x: only 64 MiB physical VMEM -> request 40 MiB for headroom.
    # v5e/v6e: 128 MiB physical (defaults 16/32 MiB) -> request 64 MiB explicitly so the larger
    # tiles never hit a silent scoped-VMEM limit failure.
    return (40 if _is_v7x() else 64) * 1024 * 1024


def _compiler_params(semantics):
    # TODO(synk): on v7x verify in the trace that the "parallel" axes are actually sharded
    # across both TensorCores; if not, switch to pltpu.CORE_PARALLEL / an explicit core axis.
    return pltpu.CompilerParams(dimension_semantics=semantics,
                                vmem_limit_bytes=_vmem_limit_bytes())


def _pick_row_tile(n_rows: int, align: int, target_rows: int) -> int:
    """Row-chunk size: multiple of `align` (sublane + batch period), ~target_rows,
    preferring an exact divisor of n_rows to avoid boundary padding."""
    target = max(align, (target_rows // align) * align)
    if n_rows <= target:
        return n_rows                       # full dim (always a multiple of B since rows = L*B)
    t = target
    while t >= align:
        if n_rows % t == 0:
            return t
        t -= align
    return target                           # padded boundary tile (OOB writes are dropped)


def _pick_divisor_tile(dim: int, align: int, target: int) -> int:
    """Largest multiple of `align` <= target dividing dim exactly, else the full dim."""
    if dim <= target:
        return dim
    t = (target // align) * align
    while t >= align:
        if dim % t == 0:
            return t
        t -= align
    return dim


def _drop_path_mask(key, batch: int, keep_prob: float):
    """Per-sample (batch-axis) mask of shape (batch, 1), float32, with 1/keep_prob folded in.

    Same math as torch: floor(keep_prob + U[0,1)); computed in f32 so bf16 rounding of
    keep_prob + u cannot shift the effective drop probability.
    """
    u = jax.random.uniform(key, (batch, 1), dtype=jnp.float32)
    return jnp.floor(keep_prob + u) * (1.0 / keep_prob)


def _mask_tile(key, batch: int, keep_prob: float, tm: int):
    """One resident (tm, 1) mask tile (tm % batch == 0) - a few KiB, built once by XLA."""
    mask_b = _drop_path_mask(key, batch, keep_prob)          # (B, 1)
    return jnp.tile(mask_b, (tm // batch, 1))                # (tm, 1)


# --------------------------------------------------------------------------- #
# Kernel bodies
# --------------------------------------------------------------------------- #
def _drop_path_kernel(x_ref, m_ref, o_ref):
    # x_ref: (TM, D); m_ref: (TM, 1) resident mask (1/keep_prob folded in).
    o_ref[...] = (x_ref[...] * m_ref[...]).astype(o_ref.dtype)


def _residual_masked_kernel(x_ref, b_ref, g_ref, m_ref, o_ref):
    # o = x + (branch * gamma) * mask      (single HBM pass over x, branch, out)
    o_ref[...] = (x_ref[...] + b_ref[...] * g_ref[...] * m_ref[...]).astype(o_ref.dtype)


def _residual_kernel(x_ref, b_ref, g_ref, o_ref):
    # eval path: o = x + branch * gamma    (no mask stream, no extra multiply)
    o_ref[...] = (x_ref[...] + b_ref[...] * g_ref[...]).astype(o_ref.dtype)


def _matmul_epilogue_masked_kernel(h_ref, w_ref, b_ref, x_ref, m_ref, o_ref, acc_ref):
    # branch = h @ (W*gamma) + bias*gamma, accumulated over the k grid axis;
    # the residual/drop-path epilogue runs only in the final-k step.
    @pl.when(pl.program_id(2) == 0)
    def _init():
        acc_ref[...] = jnp.zeros_like(acc_ref)

    acc_ref[...] += jnp.dot(h_ref[...], w_ref[...], preferred_element_type=jnp.float32)

    @pl.when(pl.program_id(2) == pl.num_programs(2) - 1)
    def _finalize():
        branch = acc_ref[...] + b_ref[...].astype(jnp.float32)
        o_ref[...] = (x_ref[...].astype(jnp.float32) + branch * m_ref[...]).astype(o_ref.dtype)


def _matmul_epilogue_kernel(h_ref, w_ref, b_ref, x_ref, o_ref, acc_ref):
    @pl.when(pl.program_id(2) == 0)
    def _init():
        acc_ref[...] = jnp.zeros_like(acc_ref)

    acc_ref[...] += jnp.dot(h_ref[...], w_ref[...], preferred_element_type=jnp.float32)

    @pl.when(pl.program_id(2) == pl.num_programs(2) - 1)
    def _finalize():
        branch = acc_ref[...] + b_ref[...].astype(jnp.float32)
        o_ref[...] = (x_ref[...].astype(jnp.float32) + branch).astype(o_ref.dtype)


# --------------------------------------------------------------------------- #
# 1. Standalone DropPath
# --------------------------------------------------------------------------- #
def drop_path(x, drop_prob: float = 0.0, training: bool = False, key=None,
              *, inplace: bool = False):
    """Exact semantics of the onepeace drop_path: per-sample (axis 1) path drop on (L, B, D)."""
    if drop_prob == 0.0 or not training:
        return x
    if key is None:
        raise ValueError(
            "drop_path: a PRNG `key` is required when training=True and drop_prob > 0")

    keep_prob = 1.0 - drop_prob
    L, B, D = x.shape
    rows = L * B

    align = (8 * B) // math.gcd(8, B)                        # lcm(8, B): whole batch groups/tile
    target_rows = max(1, _per_stream_tile_bytes() // max(D * x.dtype.itemsize, 1))
    tm = _pick_row_tile(rows, align, target_rows)
    grid = (pl.cdiv(rows, tm),)

    x2 = x.reshape(rows, D)
    mask = _mask_tile(key, B, keep_prob, tm)                 # (tm, 1), resident across grid

    out2 = pl.pallas_call(
        _drop_path_kernel,
        out_shape=jax.ShapeDtypeStruct((rows, D), x.dtype),
        grid=grid,
        in_specs=[
            pl.BlockSpec((tm, D), lambda i: (i, 0)),         # streamed activation tile
            pl.BlockSpec((tm, 1), lambda i: (0, 0)),         # tiny mask, fetched once
        ],
        out_specs=pl.BlockSpec((tm, D), lambda i: (i, 0)),
        compiler_params=_compiler_params(("parallel",)),
        input_output_aliases=({0: 0} if inplace else {}),
    )(x2, mask)
    return out2.reshape(L, B, D)


# --------------------------------------------------------------------------- #
# 2. Elementwise fused residual epilogue:  x + drop_path(gamma * branch)
# --------------------------------------------------------------------------- #
def fused_layer_scale_drop_path_residual(x, branch, gamma, drop_prob: float = 0.0,
                                         training: bool = False, key=None,
                                         *, inplace: bool = False):
    """x + drop_path(gamma * branch) in a single HBM pass (for pre-materialised `branch`)."""
    L, B, D = x.shape
    rows = L * B
    masked = training and drop_prob > 0.0
    if masked and key is None:
        raise ValueError(
            "fused residual: a PRNG `key` is required when training=True and drop_prob > 0")

    x2 = x.reshape(rows, D)
    b2 = branch.reshape(rows, D)
    g2 = gamma.reshape(1, D).astype(jnp.float32)

    align = (8 * B) // math.gcd(8, B) if masked else 8
    itemsize = max(x.dtype.itemsize, branch.dtype.itemsize)
    # Size by *per-stream* bytes (x / branch / out are each one stream).
    target_rows = max(1, _per_stream_tile_bytes() // max(D * itemsize, 1))
    tm = _pick_row_tile(rows, align, target_rows)
    grid = (pl.cdiv(rows, tm),)

    in_specs = [
        pl.BlockSpec((tm, D), lambda i: (i, 0)),             # residual stream x
        pl.BlockSpec((tm, D), lambda i: (i, 0)),             # sub-block output
        pl.BlockSpec((1, D), lambda i: (0, 0)),              # gamma resident
    ]
    args = [x2, b2, g2]
    kernel = _residual_kernel
    if masked:
        in_specs.append(pl.BlockSpec((tm, 1), lambda i: (0, 0)))   # resident mask tile
        args.append(_mask_tile(key, B, 1.0 - drop_prob, tm))
        kernel = _residual_masked_kernel
    # TODO(synk): sweep pipeline_mode=pl.Buffered(3) on the two streamed inputs on v7x.

    out2 = pl.pallas_call(
        kernel,
        out_shape=jax.ShapeDtypeStruct((rows, D), x.dtype),
        grid=grid,
        in_specs=in_specs,
        out_specs=pl.BlockSpec((tm, D), lambda i: (i, 0)),
        compiler_params=_compiler_params(("parallel",)),
        input_output_aliases=({0: 0} if inplace else {}),
    )(*args)
    return out2.reshape(L, B, D)


# --------------------------------------------------------------------------- #
# 3. Matmul-fused epilogue:  x + drop_path(gamma * (h @ W + bias))
#    (the residual pattern around both sub-blocks of _inner_forward; `branch`
#     never touches HBM — the epilogue runs in the matmul's final-k step)
# --------------------------------------------------------------------------- #
def fused_out_proj_drop_path_residual(x, h, weight, bias, gamma,
                                      drop_prob: float = 0.0, training: bool = False,
                                      key=None, *, inplace: bool = False,
                                      tm_rows: int = 256, tn: int = 512, tk: int = 512):
    """x: (L, B, D) residual; h: (L, B, K) sub-block activation;
    weight: (K, D) (torch Linear weight transposed); bias: (D,); gamma: (D,)."""
    L, B, D = x.shape
    K = h.shape[-1]
    rows = L * B
    masked = training and drop_prob > 0.0
    if masked and key is None:
        raise ValueError(
            "fused matmul epilogue: a PRNG `key` is required when training=True and drop_prob > 0")

    # Fold gamma into the producer weights/bias: removes a resident input and one
    # per-element multiply from the kernel (O(K*D) wrapper work vs O(rows*K) matmul).
    g32 = gamma.astype(jnp.float32)
    w_eff = (weight.astype(jnp.float32) * g32[None, :]).astype(weight.dtype)
    bias_eff = (bias.astype(jnp.float32) * g32).reshape(1, D)

    x2 = x.reshape(rows, D)
    h2 = h.reshape(rows, K)

    align = (8 * B) // math.gcd(8, B) if masked else 8
    tm = _pick_row_tile(rows, align, tm_rows)
    tn_t = _pick_divisor_tile(D, 128, tn)
    tk_t = _pick_divisor_tile(K, 128, tk)                    # reduction axis: exact division
    grid = (pl.cdiv(rows, tm), D // tn_t, K // tk_t)

    in_specs = [
        pl.BlockSpec((tm, tk_t), lambda i, j, k: (i, k)),    # h tile
        pl.BlockSpec((tk_t, tn_t), lambda i, j, k: (k, j)),  # gamma-folded weight tile
        pl.BlockSpec((1, tn_t), lambda i, j, k: (0, j)),     # gamma-folded bias
        pl.BlockSpec((tm, tn_t), lambda i, j, k: (i, j)),    # residual x (resident over k)
    ]
    args = [h2, w_eff, bias_eff, x2]
    kernel = _matmul_epilogue_kernel
    if masked:
        in_specs.append(pl.BlockSpec((tm, 1), lambda i, j, k: (0, 0)))   # resident mask tile
        args.append(_mask_tile(key, B, 1.0 - drop_prob, tm))
        kernel = _matmul_epilogue_masked_kernel

    out2 = pl.pallas_call(
        kernel,
        out_shape=jax.ShapeDtypeStruct((rows, D), x.dtype),
        grid=grid,
        in_specs=in_specs,
        out_specs=pl.BlockSpec((tm, tn_t), lambda i, j, k: (i, j)),
        scratch_shapes=[pltpu.VMEM((tm, tn_t), jnp.float32)],
        compiler_params=_compiler_params(("parallel", "parallel", "arbitrary")),
        input_output_aliases=({3: 0} if inplace else {}),
    )(*args)
    return out2.reshape(L, B, D)


class DropPath:
    """Mirror of the PyTorch DropPath module (no learnable parameters)."""

    def __init__(self, drop_prob=None):
        self.drop_prob = drop_prob
        self.training = True

    def __call__(self, x, key=None):
        p = 0.0 if self.drop_prob is None else float(self.drop_prob)
        return drop_path(x, p, self.training, key=key)


if __name__ == "__main__":
    # Small shapes consistent with the module's seq-first (L, B, D) usage.
    L, B, D = 8, 2, 128
    K = 128                                                  # out-projection: D -> D
    root = jax.random.PRNGKey(0)
    kx, kb, kh, kw, kbi, km = jax.random.split(root, 6)

    x = jax.random.normal(kx, (L, B, D), dtype=jnp.float32)
    branch = jax.random.normal(kb, (L, B, D), dtype=jnp.float32)
    h = jax.random.normal(kh, (L, B, K), dtype=jnp.float32)
    w = 0.05 * jax.random.normal(kw, (K, D), dtype=jnp.float32)     # torch weight, transposed
    bias = 0.05 * jax.random.normal(kbi, (D,), dtype=jnp.float32)
    gamma = 0.01 * jnp.ones((D,), dtype=jnp.float32)                # layer_scale_init_value

    drop_prob = 0.2
    keep_prob = 1.0 - drop_prob
    mask3 = _drop_path_mask(km, B, keep_prob).reshape(1, B, 1)      # reference mask (scaled)

    # --- standalone DropPath (training) -------------------------------------
    module = DropPath(drop_prob=drop_prob)
    module.training = True
    y = jax.block_until_ready(module(x, key=km))
    assert y.shape == x.shape and y.dtype == x.dtype
    assert jnp.allclose(y, x * mask3, atol=1e-6, rtol=1e-6)

    # --- eval / drop_prob == 0: identity, no kernel launch ------------------
    module.training = False
    assert jnp.array_equal(jax.block_until_ready(module(x, key=km)), x)

    # --- elementwise fused residual epilogue --------------------------------
    y_f = jax.block_until_ready(fused_layer_scale_drop_path_residual(
        x, branch, gamma, drop_prob=drop_prob, training=True, key=km))
    assert jnp.allclose(y_f, x + (branch * gamma[None, None, :]) * mask3, atol=1e-6, rtol=1e-6)

    y_fe = jax.block_until_ready(fused_layer_scale_drop_path_residual(
        x, branch, gamma, drop_prob=drop_prob, training=False))
    assert jnp.allclose(y_fe, x + branch * gamma[None, None, :], atol=1e-6, rtol=1e-6)

    # --- matmul + layer-scale + drop-path + residual, fused in final-k step -
    branch_ref = jnp.einsum("lbk,kd->lbd", h, w) + bias[None, None, :]
    y_m = jax.block_until_ready(fused_out_proj_drop_path_residual(
        x, h, w, bias, gamma, drop_prob=drop_prob, training=True, key=km))
    assert jnp.allclose(y_m, x + (gamma[None, None, :] * branch_ref) * mask3,
                        atol=1e-4, rtol=1e-4)

    y_me = jax.block_until_ready(fused_out_proj_drop_path_residual(
        x, h, w, bias, gamma, drop_prob=drop_prob, training=False))
    assert jnp.allclose(y_me, x + gamma[None, None, :] * branch_ref, atol=1e-4, rtol=1e-4)

    print("KERNEL_OK")
</pallas_src>

<mosaic_0001>
module attributes {stable_mosaic.version = 11 : i64} {
  func.func @_drop_path_kernel(%arg0: i32, %arg1: memref<16x128xf32, #tpu.memory_space<vmem>>, %arg2: memref<16x1xf32, #tpu.memory_space<vmem>>, %arg3: memref<16x128xf32, #tpu.memory_space<vmem>>) attributes {dimension_semantics = [#tpu.dimension_semantics<parallel>], iteration_bounds = array<i64: 1>, scalar_prefetch = 0 : i64, scratch_operands = 0 : i64, tpu.core_type = #tpu.core_type<tc>, window_params = [{transform_indices = @transform_0, window_bounds = array<i64: 16, 128>}, {pipeline_mode = #tpu.pipeline_mode<synchronous>, transform_indices = @transform_1, window_bounds = array<i64: 16, 1>}, {transform_indices = @transform_2, window_bounds = array<i64: 16, 128>}]} {
    %c0 = arith.constant 0 : index
    %c0_0 = arith.constant 0 : index
    %0 = vector.load %arg1[%c0, %c0_0] : memref<16x128xf32, #tpu.memory_space<vmem>>, vector<16x128xf32>
    %c0_1 = arith.constant 0 : index
    %c0_2 = arith.constant 0 : index
    %1 = vector.load %arg2[%c0_1, %c0_2] : memref<16x1xf32, #tpu.memory_space<vmem>>, vector<16x1xf32>
    %2 = vector.broadcast %1 : vector<16x1xf32> to vector<16x128xf32>
    %3 = arith.mulf %0, %2 : vector<16x128xf32>
    %c0_3 = arith.constant 0 : index
    %c0_4 = arith.constant 0 : index
    %4 = vector.load %arg3[%c0_3, %c0_4] : memref<16x128xf32, #tpu.memory_space<vmem>>, vector<16x128xf32>
    tpu.vector_store %arg3[%c0_3, %c0_4], %3 {strides = array<i32>} : memref<16x128xf32, #tpu.memory_space<vmem>>, vector<16x128xf32>,
    return
  }
  func.func @transform_0(%arg0: i32) -> (i32, i32) {
    %c0_i32 = arith.constant 0 : i32
    %c0_i32_0 = arith.constant 0 : i32
    return %arg0, %c0_i32 : i32, i32
  }
  func.func @transform_1(%arg0: i32) -> (i32, i32) {
    %c0_i32 = arith.constant 0 : i32
    %c0_i32_0 = arith.constant 0 : i32
    %c0_i32_1 = arith.constant 0 : i32
    return %c0_i32, %c0_i32_0 : i32, i32
  }
  func.func @transform_2(%arg0: i32) -> (i32, i32) {
    %c0_i32 = arith.constant 0 : i32
    %c0_i32_0 = arith.constant 0 : i32
    return %arg0, %c0_i32 : i32, i32
  }
}

</mosaic_0001>

<llo_original>
// kernel: tpu_custom_call.1
$region0: #{tpu_custom_call.1}
  #allocation0 [shape = 'u32[]', space=smem, size = 0x4, offset = 0x4, fixed_abs, tag = 'smem constant byte address 0x4 - core index']
  #allocation1 [shape = 'u32[72,128]{1,0:T(1,128)}', space=vmem, size = 0x9000, scoped, tag = 'internal scratch']
  %s0 = inlined_call_operand.vmem [shape: f32[16,128], index: 0, kind: input, shape index: {}]
  %s1 = inlined_call_operand.vmem [shape: f32[16,1], index: 1, kind: input, shape index: {}]
  %s2 = inlined_call_operand.hbm [shape: f32[16,128], index: 2, kind: output, shape index: {}]
  %s3 = sld [smem:[#allocation0]]
  $region18: #{tpu_custom_call.1} parent=0
    _
  %s5 = ssub.s32 1, %s3
  %s6 = scalar_select 0, %s5, %s3
  $region1: #{tpu_custom_call.1} parent=0
    #allocation2 [shape = 'u8[8192]{0}', space=vmem, size = 0x2000, scoped, tag = 'output window, operand 0, single buffered']
    #allocation3 [shape = 's32[1]{0}', space=sflag, size = 0x4, scoped, tag = 'scoped memory for tpu_custom_call.1']
    %7 = vsyncpa [#allocation3], 0
    // Predicated region
    $region2: #{tpu_custom_call.1} parent=1 // pred_check
      _
    $region3: #{tpu_custom_call.1} parent=1 // pred_check_branch
      %9 = sbr.rel (0) target = $region5
    $region4: #{tpu_custom_call.1} parent=1 // pred_region
      _
    $region5: #{tpu_custom_call.1} parent=1 // pred_fallthru
      _
    // Predicated region
    $region6: #{tpu_custom_call.1} parent=1 // pred_check
      _
    $region7: #{tpu_custom_call.1} parent=1 // pred_check_branch
      %11 = sbr.rel (0) target = $region9
    $region8: #{tpu_custom_call.1} parent=1 // pred_region
      _
    $region9: #{tpu_custom_call.1} parent=1 // pred_fallthru
      _
    %v12 = vld [vmem:[%s0] sm:$0xff]
    %v13 = vld [vmem:[%s0 + $0x8] sm:$0xff]
    %v14 = vld [vmem:[%s1] sm:$0xff]
    %v15 = vld [vmem:[%s1 + $0x8] sm:$0xff]
    %17 = vset.pattern.permute.xlu0 0
    %18 = vperm.xlu0 %17, %v14
    %v19 = vpop.permute.xlu0 %18
    %22 = vset.pattern.permute.xlu0 0
    %23 = vperm.xlu0 %22, %v15
    %v24 = vpop.permute.xlu0 %23
    %v26 = vmul.f32 %v12, %v19
    %v27 = vmul.f32 %v13, %v24
    %28 = vst [vmem:[#allocation2] sm:$0xff] %v26
    %29 = vst [vmem:[#allocation2 + $0x8] sm:$0xff] %v27
    // Predicated region
    $region10: #{tpu_custom_call.1} parent=1 // pred_check
      _
    $region11: #{tpu_custom_call.1} parent=1 // pred_check_branch
      %31 = sbr.rel (0) target = $region13
    $region12: #{tpu_custom_call.1} parent=1 // pred_region
      %33 = vsyncadd [#allocation3], 0
      %s34 = sshll.u32 [#allocation2], 4
      %s35 = int_to_ptr.vmem [resolvable:$true] %s34
      %s36 = sshll.u32 %s2, 4
      %s37 = int_to_ptr.hbm [resolvable:$true] %s36
      %42 = dma.vmem_to_hbm [thread:$0]  %s35, 256, %s37, [#allocation3], 128, 128, 8
    $region13: #{tpu_custom_call.1} parent=1 // pred_fallthru
      _
    // Predicated region
    $region14: #{tpu_custom_call.1} parent=1 // pred_check
      _
    $region15: #{tpu_custom_call.1} parent=1 // pred_check_branch
      %44 = sbr.rel (0) target = $region17
    $region16: #{tpu_custom_call.1} parent=1 // pred_region
      %46 = dma.done [#allocation3], 256
    $region17: #{tpu_custom_call.1} parent=1 // pred_fallthru
      _
    %47 = vsyncpa [#allocation3], 1

</llo_original>
